<compile_context>
chip_gen: v6e
topology: v6e:2x2x1
jax: 0.10.0
libtpu: 0.0.40
codegen_flags: <defaults>
</compile_context>

<pallas_src>
import math
from functools import partial

import jax
import jax.numpy as jnp
from jax.experimental import pallas as pl
from jax.experimental.pallas import tpu as pltpu


def _relation_kernel(fa_ref, wkqv_ref, wfix_row_ref, out_ref, *, n, dk):
    """One grid step = one flattened (block_b*N, df) slab of batch rows.

    fa_ref       : (block_b*N, df)   flattened f_a rows for block_b batches
    wkqv_ref     : (df, 2*dk + dv)   fused [WK | WQ/sqrt(dk) | WV]
    wfix_row_ref : (N, 1)            rowsum(w_fix) - diag(w_fix)
    out_ref      : (block_b*N, dv)
    """
    rows = fa_ref.shape[0]
    block_b = rows // n

    x = fa_ref[...]                  # (rows, df)
    w_kqv = wkqv_ref[...]            # (df, 2dk+dv); 1/sqrt(dk) already in Q cols
    wfix_row = wfix_row_ref[...]     # (N, 1)

    # ONE fused projection matmul for every row in this grid step.
    kqv = jnp.dot(x, w_kqv, preferred_element_type=jnp.float32)     # (rows, 2dk+dv)

    k = kqv[:, :dk].reshape(block_b, n, dk)
    q = kqv[:, dk:2 * dk].reshape(block_b, n, dk)   # pre-scaled by 1/sqrt(dk)
    v = kqv[:, 2 * dk:]                             # stays flat: (rows, dv)

    # Batched scores: S[b, m, nn] = <K[b, m], Q[b, nn]> (scale already folded).
    s = jnp.einsum("bmd,bnd->bmn", k, q,
                   preferred_element_type=jnp.float32)              # (block_b, N, N)

    row = jax.lax.broadcasted_iota(jnp.int32, (n, n), 0)
    col = jax.lax.broadcasted_iota(jnp.int32, (n, n), 1)
    diag = (row == col)[None]                                       # (1, N, N)
    # NOTE: the rowsum rewrite below requires S[m,m] to be masked to exactly
    # 0.0 BEFORE the softmax (so exp(S[m,m]-m_max) == exp(-m_max)). Keep the
    # mask value/placement in sync with the PyTorch module if it ever changes.
    s = jnp.where(diag, 0.0, s)

    # Only the softmax row statistics are needed for rowsum(A):
    #   rowsum(softmax(S) + w_fix, diag zeroed)
    #     = (1 - softmax(S)[m,m]) + (rowsum(w_fix)[m] - w_fix[m,m])
    m_max = jnp.max(s, axis=-1, keepdims=True)                      # (block_b, N, 1)
    denom = jnp.sum(jnp.exp(s - m_max), axis=-1, keepdims=True)     # (block_b, N, 1)
    softmax_diag = jnp.exp(-m_max) / denom                          # (block_b, N, 1)
    rowsum = (1.0 - softmax_diag) + wfix_row[None]                  # (block_b, N, 1)

    # Exact PyTorch broadcast quirk: out[b, m, :] = V[b, m, :] * rowsum[b, m].
    out_ref[...] = (v * rowsum.reshape(rows, 1)).astype(out_ref.dtype)


def prepare_relation_params(wk, wq, wv, w_fix):
    """Once-per-model parameter fusion (NOT per forward call).

    wk, wq : [df, dk]   (PyTorch nn.Linear weight, transposed)
    wv     : [df, dv]
    w_fix  : [N, N]
    Returns (w_kqv [df, 2dk+dv], wfix_row [N, 1]).
    """
    dk = wk.shape[1]
    n = w_fix.shape[0]
    # Fuse the three projections; fold the 1/sqrt(dk) score scale into WQ.
    w_kqv = jnp.concatenate([wk, wq * (1.0 / math.sqrt(dk)), wv], axis=1)
    # Only rowsum(A) is ever needed -> precompute w_fix's per-row contribution.
    wfix_row = (jnp.sum(w_fix, axis=1) - jnp.diagonal(w_fix)).reshape(n, 1)
    return w_kqv, wfix_row


def _num_tensorcores_per_device():
    """Best-effort TC-per-chip query (1 on v5e/v6e, 2 on v7x); falls back to 1."""
    try:
        info = pltpu.get_tpu_info()
        for attr in ("num_tensorcores", "num_cores", "num_cores_per_chip",
                     "tensorcores_per_chip"):
            val = getattr(info, attr, None)
            if isinstance(val, int) and val > 0:
                return val
    except Exception:
        pass
    try:
        val = getattr(jax.devices()[0], "num_cores", None)
        if isinstance(val, int) and val > 0:
            return val
    except Exception:
        pass
    return 1


def _block_vmem_bytes(block_b, n, df, dk, dv):
    """Conservative VMEM footprint estimate for one grid step (f32)."""
    f32 = 4
    io = 2 * block_b * n * (df + dv) * f32          # double-buffered in/out blocks
    weights = 2 * (df * (2 * dk + dv) + n) * f32    # fused W + wfix_row, double-buffered
    kqv = block_b * n * (2 * dk + dv) * f32         # fused projection result
    scores = 3 * block_b * n * n * f32              # s, exp(s - m_max), select temps
    return io + weights + kqv + scores


def _pick_block_b(B, n, df, dk, dv, *, min_grid_steps, vmem_budget_bytes):
    """Largest divisor of B giving >= min_grid_steps grid steps within budget."""
    best = 1
    for cand in range(1, B + 1):
        if B % cand:
            continue
        if B // cand < min_grid_steps:
            continue
        if _block_vmem_bytes(cand, n, df, dk, dv) > vmem_budget_bytes:
            continue
        best = max(best, cand)
    return best


def relation_unit_forward(f_a, w_kqv, wfix_row, *, dk, block_b=None,
                          vmem_budget_bytes=24 << 20):
    """f_a: [B, N, df]; w_kqv: [df, 2dk+dv]; wfix_row: [N, 1] -> [B, N, dv]."""
    B, N, df = f_a.shape
    dv = w_kqv.shape[1] - 2 * dk

    if block_b is None:
        # Single grid step on 1-TC chips; >= num_TC steps where megacore helps.
        min_steps = _num_tensorcores_per_device()
        block_b = _pick_block_b(B, N, df, dk, dv,
                                min_grid_steps=min_steps,
                                vmem_budget_bytes=vmem_budget_bytes)
    assert B % block_b == 0, "block_b must divide B"
    grid_b = B // block_b
    rows = block_b * N

    # Free reshape of contiguous HBM: kernel sees dense 2-D slabs.
    f_flat = f_a.reshape(B * N, df)

    compiler_kwargs = dict(dimension_semantics=("parallel",))
    est = _block_vmem_bytes(block_b, N, df, dk, dv)
    if est > (12 << 20):
        # Default scoped VMEM (16 MiB on v5e, 32 MiB on v6e/v7x) may bite as
        # shapes scale; cap below v7x's 64 MiB physical per-TC VMEM.
        compiler_kwargs["vmem_limit_bytes"] = int(min(max(2 * est, 16 << 20), 48 << 20))

    kernel = partial(_relation_kernel, n=N, dk=dk)

    out_flat = pl.pallas_call(
        kernel,
        out_shape=jax.ShapeDtypeStruct((B * N, dv), f_a.dtype),
        grid_spec=pltpu.PrefetchScalarGridSpec(
            num_scalar_prefetch=0,
            grid=(grid_b,),
            in_specs=[
                pl.BlockSpec((rows, df), lambda b: (b, 0)),           # flattened f_a
                pl.BlockSpec((df, 2 * dk + dv), lambda b: (0, 0)),    # fused W_KQV
                pl.BlockSpec((N, 1), lambda b: (0, 0)),               # w_fix row term
            ],
            out_specs=pl.BlockSpec((rows, dv), lambda b: (b, 0)),
        ),
        compiler_params=pltpu.CompilerParams(**compiler_kwargs),
    )(f_flat, w_kqv, wfix_row)

    return out_flat.reshape(B, N, dv)


if __name__ == "__main__":
    # Small shapes consistent with the module: B frames, N atoms, df relation feature dim.
    B, N = 2, 8
    appearance_feature_dim = 32   # df
    key_feature_dim = 16          # dk
    value_feature_dim = 32        # dv

    key = jax.random.PRNGKey(0)
    k_fa, k_wk, k_wq, k_wv, k_wfix = jax.random.split(key, 5)

    f_a = jax.random.normal(k_fa, (B, N, appearance_feature_dim), dtype=jnp.float32)

    # Deterministic parameter init (shapes from __init__). Linear weights stored as [df, dk/dv].
    lim_lin = 1.0 / math.sqrt(appearance_feature_dim)
    wk = jax.random.uniform(k_wk, (appearance_feature_dim, key_feature_dim),
                            minval=-lim_lin, maxval=lim_lin, dtype=jnp.float32)
    wq = jax.random.uniform(k_wq, (appearance_feature_dim, key_feature_dim),
                            minval=-lim_lin, maxval=lim_lin, dtype=jnp.float32)
    wv = jax.random.uniform(k_wv, (appearance_feature_dim, value_feature_dim),
                            minval=-lim_lin, maxval=lim_lin, dtype=jnp.float32)
    lim_fix = 1.0 / math.sqrt(N)
    w_fix = jax.random.uniform(k_wfix, (N, N),
                               minval=-lim_fix, maxval=lim_fix, dtype=jnp.float32)

    # Parameter fusion done ONCE (not per forward call).
    w_kqv, wfix_row = prepare_relation_params(wk, wq, wv, w_fix)
    w_kqv = jax.block_until_ready(w_kqv)
    wfix_row = jax.block_until_ready(wfix_row)

    out = relation_unit_forward(f_a, w_kqv, wfix_row, dk=key_feature_dim)
    jax.block_until_ready(out)

    # Pure-JAX reference check (mirrors the PyTorch forward exactly, unfused).
    def ref(f_a, wk, wq, wv, w_fix):
        k = f_a @ wk
        q = f_a @ wq
        v = f_a @ wv
        s = jnp.einsum("bmd,bnd->bmn", k, q) / math.sqrt(key_feature_dim)
        eye = jnp.eye(N, dtype=bool)
        s = jnp.where(eye, 0.0, s)
        a = jax.nn.softmax(s, axis=-1)
        a = a + w_fix
        a = jnp.where(eye, 0.0, a)
        return v * jnp.sum(a, axis=-1, keepdims=True)

    expected = ref(f_a, wk, wq, wv, w_fix)
    assert out.shape == (B, N, value_feature_dim)
    # Slightly relaxed vs. exact-path tolerance: the rowsum algebraic rewrite
    # (1 - softmax_diag) and the 1/sqrt(dk) fold reassociate f32 arithmetic.
    assert jnp.allclose(out, expected, atol=1e-4, rtol=1e-4), "mismatch vs reference"

    print("KERNEL_OK")
</pallas_src>

<mosaic_0001>
module attributes {stable_mosaic.version = 11 : i64} {
  func.func @_relation_kernel(%arg0: i32, %arg1: memref<16x32xf32, #tpu.memory_space<vmem>>, %arg2: memref<32x64xf32, #tpu.memory_space<vmem>>, %arg3: memref<8x1xf32, #tpu.memory_space<vmem>>, %arg4: memref<16x32xf32, #tpu.memory_space<vmem>>) attributes {dimension_semantics = [#tpu.dimension_semantics<parallel>], iteration_bounds = array<i64: 1>, scalar_prefetch = 0 : i64, scratch_operands = 0 : i64, tpu.core_type = #tpu.core_type<tc>, window_params = [{transform_indices = @transform_0, window_bounds = array<i64: 16, 32>}, {pipeline_mode = #tpu.pipeline_mode<synchronous>, transform_indices = @transform_1, window_bounds = array<i64: 32, 64>}, {pipeline_mode = #tpu.pipeline_mode<synchronous>, transform_indices = @transform_2, window_bounds = array<i64: 8, 1>}, {transform_indices = @transform_3, window_bounds = array<i64: 16, 32>}]} {
    %c0 = arith.constant 0 : index
    %c0_0 = arith.constant 0 : index
    %0 = vector.load %arg1[%c0, %c0_0] : memref<16x32xf32, #tpu.memory_space<vmem>>, vector<16x32xf32>
    %c0_1 = arith.constant 0 : index
    %c0_2 = arith.constant 0 : index
    %1 = vector.load %arg2[%c0_1, %c0_2] : memref<32x64xf32, #tpu.memory_space<vmem>>, vector<32x64xf32>
    %c0_3 = arith.constant 0 : index
    %c0_4 = arith.constant 0 : index
    %2 = vector.load %arg3[%c0_3, %c0_4] : memref<8x1xf32, #tpu.memory_space<vmem>>, vector<8x1xf32>
    %cst = arith.constant dense<0.000000e+00> : vector<16x64xf32>
    %3 = tpu.matmul %0, %1, %cst {dimension_numbers = #tpu.dot_dimension_numbers<[1], [0], [0], [1], [0, 0, 1, 1], [], []>} : vector<16x32xf32>, vector<32x64xf32>, vector<16x64xf32> -> vector<16x64xf32>
    %4 = vector.extract_strided_slice %3 {offsets = [0, 0], sizes = [16, 16], strides = [1, 1]} : vector<16x64xf32> to vector<16x16xf32>
    %5 = vector.shape_cast %4 : vector<16x16xf32> to vector<2x8x16xf32>
    %6 = vector.extract_strided_slice %3 {offsets = [0, 16], sizes = [16, 16], strides = [1, 1]} : vector<16x64xf32> to vector<16x16xf32>
    %7 = vector.shape_cast %6 : vector<16x16xf32> to vector<2x8x16xf32>
    %8 = vector.extract_strided_slice %3 {offsets = [0, 32], sizes = [16, 32], strides = [1, 1]} : vector<16x64xf32> to vector<16x32xf32>
    "tpu.trace_start"() <{level = 10 : i32, message = "bmd,bnd->bmn"}> : () -> ()
    %cst_5 = arith.constant dense<0.000000e+00> : vector<2x8x8xf32>
    %9 = tpu.matmul %5, %7, %cst_5 {dimension_numbers = #tpu.dot_dimension_numbers<[2], [2], [1], [1], [0, 0, 0, 1, 1, 1], [0], [0]>} : vector<2x8x16xf32>, vector<2x8x16xf32>, vector<2x8x8xf32> -> vector<2x8x8xf32>
    "tpu.trace_stop"() : () -> ()
    %10 = tpu.iota {dimensions = array<i32: 0>} : vector<8x8xi32>
    %11 = tpu.iota {dimensions = array<i32: 1>} : vector<8x8xi32>
    %12 = arith.cmpi eq, %10, %11 : vector<8x8xi32>
    %13 = vector.shape_cast %12 : vector<8x8xi1> to vector<1x8x8xi1>
    %cst_6 = arith.constant 0.000000e+00 : f32
    %14 = vector.shape_cast %13 : vector<1x8x8xi1> to vector<1x8x8xi1>
    %15 = vector.broadcast %14 : vector<1x8x8xi1> to vector<2x8x8xi1>
    %16 = vector.broadcast %cst_6 : f32 to vector<2x8x8xf32>
    %17 = arith.select %15, %16, %9 : vector<2x8x8xi1>, vector<2x8x8xf32>
    %cst_7 = arith.constant dense<0xFF800000> : vector<2x8xf32>
    %18 = vector.multi_reduction <maximumf>, %17, %cst_7 [2] : vector<2x8x8xf32> to vector<2x8xf32>
    %19 = vector.shape_cast %18 : vector<2x8xf32> to vector<2x8x1xf32>
    %20 = vector.broadcast %19 : vector<2x8x1xf32> to vector<2x8x8xf32>
    %21 = arith.subf %17, %20 : vector<2x8x8xf32>
    %22 = math.exp %21 : vector<2x8x8xf32>
    %cst_8 = arith.constant dense<0.000000e+00> : vector<2x8xf32>
    %23 = vector.multi_reduction <add>, %22, %cst_8 [2] : vector<2x8x8xf32> to vector<2x8xf32>
    %24 = vector.shape_cast %23 : vector<2x8xf32> to vector<2x8x1xf32>
    %cst_9 = arith.constant 0.000000e+00 : f32
    %25 = vector.broadcast %cst_9 : f32 to vector<2x8x1xf32>
    %26 = arith.subf %25, %19 : vector<2x8x1xf32>
    %27 = math.exp %26 : vector<2x8x1xf32>
    %28 = arith.divf %27, %24 : vector<2x8x1xf32>
    %cst_10 = arith.constant 1.000000e+00 : f32
    %29 = vector.broadcast %cst_10 : f32 to vector<2x8x1xf32>
    %30 = arith.subf %29, %28 : vector<2x8x1xf32>
    %31 = vector.shape_cast %2 : vector<8x1xf32> to vector<1x8x1xf32>
    %32 = vector.broadcast %31 : vector<1x8x1xf32> to vector<2x8x1xf32>
    %33 = arith.addf %30, %32 : vector<2x8x1xf32>
    %34 = vector.shape_cast %33 : vector<2x8x1xf32> to vector<16x1xf32>
    %35 = vector.broadcast %34 : vector<16x1xf32> to vector<16x32xf32>
    %36 = arith.mulf %8, %35 : vector<16x32xf32>
    %c0_11 = arith.constant 0 : index
    %c0_12 = arith.constant 0 : index
    %37 = vector.load %arg4[%c0_11, %c0_12] : memref<16x32xf32, #tpu.memory_space<vmem>>, vector<16x32xf32>
    tpu.vector_store %arg4[%c0_11, %c0_12], %36 {strides = array<i32>} : memref<16x32xf32, #tpu.memory_space<vmem>>, vector<16x32xf32>,
    return
  }
  func.func @transform_0(%arg0: i32) -> (i32, i32) {
    %c0_i32 = arith.constant 0 : i32
    %c0_i32_0 = arith.constant 0 : i32
    return %arg0, %c0_i32 : i32, i32
  }
  func.func @transform_1(%arg0: i32) -> (i32, i32) {
    %c0_i32 = arith.constant 0 : i32
    %c0_i32_0 = arith.constant 0 : i32
    %c0_i32_1 = arith.constant 0 : i32
    return %c0_i32, %c0_i32_0 : i32, i32
  }
  func.func @transform_2(%arg0: i32) -> (i32, i32) {
    %c0_i32 = arith.constant 0 : i32
    %c0_i32_0 = arith.constant 0 : i32
    %c0_i32_1 = arith.constant 0 : i32
    return %c0_i32, %c0_i32_0 : i32, i32
  }
  func.func @transform_3(%arg0: i32) -> (i32, i32) {
    %c0_i32 = arith.constant 0 : i32
    %c0_i32_0 = arith.constant 0 : i32
    return %arg0, %c0_i32 : i32, i32
  }
}

</mosaic_0001>

<llo_original>
// kernel: tpu_custom_call.1
$region0: #{tpu_custom_call.1}
  #allocation0 [shape = 'u32[]', space=smem, size = 0x4, offset = 0x4, fixed_abs, tag = 'smem constant byte address 0x4 - core index']
  #allocation1 [shape = 'u32[144,128]{1,0:T(1,128)}', space=vmem, size = 0x12000, scoped, tag = 'internal scratch']
  %s0 = inlined_call_operand.hbm [shape: f32[16,32], index: 0, kind: input, shape index: {}]
  %s1 = inlined_call_operand.hbm [shape: f32[32,64], index: 1, kind: input, shape index: {}]
  %s2 = inlined_call_operand.vmem [shape: f32[8,1], index: 2, kind: input, shape index: {}]
  %s3 = inlined_call_operand.hbm [shape: f32[16,32], index: 3, kind: output, shape index: {}]
  %s4 = sld [smem:[#allocation0]]
  $region30: #{tpu_custom_call.1} parent=0
    _
  %s6 = ssub.s32 1, %s4
  %s7 = scalar_select 0, %s6, %s4
  $region1: #{tpu_custom_call.1} parent=0
    #allocation2 [shape = 'u8[8192]{0}', space=vmem, size = 0x2000, scoped, tag = 'input window, operand 0, single buffered']
    #allocation3 [shape = 's32[1]{0}', space=sflag, size = 0x4, scoped, tag = 'scoped memory for tpu_custom_call.1']
    #allocation4 [shape = 's32[1]{0}', space=sflag, size = 0x4, scoped, tag = 'scoped memory for tpu_custom_call.1']
    #allocation5 [shape = 'u8[16384]{0}', space=vmem, size = 0x4000, scoped, tag = 'input window, operand 1, single buffered']
    #allocation6 [shape = 's32[1]{0}', space=sflag, size = 0x4, scoped, tag = 'scoped memory for tpu_custom_call.1']
    #allocation7 [shape = 'u8[8192]{0}', space=vmem, size = 0x2000, scoped, tag = 'output window, operand 0, single buffered']
    %8 = vsyncpa [#allocation3], 0
    %9 = vsyncpa [#allocation6], 0
    %10 = vsyncpa [#allocation4], 0
    // Predicated region
    $region2: #{tpu_custom_call.1} parent=1 // pred_check
      _
    $region3: #{tpu_custom_call.1} parent=1 // pred_check_branch
      %12 = sbr.rel (0) target = $region5
    $region4: #{tpu_custom_call.1} parent=1 // pred_region
      %s14 = ssub.s32 256, 256
      %15 = vsyncadd [#allocation3], %s14
      %s16 = sshll.u32 [#allocation2], 4
      %s17 = int_to_ptr.vmem [resolvable:$true] %s16
      %22 = dma.hbm_to_vmem [thread:$0]  %s0, 256, %s17, [#allocation3], 128, 128, 8
    $region5: #{tpu_custom_call.1} parent=1 // pred_fallthru
      _
    // Predicated region
    $region6: #{tpu_custom_call.1} parent=1 // pred_check
      _
    $region7: #{tpu_custom_call.1} parent=1 // pred_check_branch
      %24 = sbr.rel (0) target = $region9
    $region8: #{tpu_custom_call.1} parent=1 // pred_region
      %s26 = ssub.s32 512, 512
      %27 = vsyncadd [#allocation6], %s26
      %s28 = sshll.u32 [#allocation5], 4
      %s29 = int_to_ptr.vmem [resolvable:$true] %s28
      %34 = dma.hbm_to_vmem [thread:$0]  %s1, 512, %s29, [#allocation6], 128, 128, 8
    $region9: #{tpu_custom_call.1} parent=1 // pred_fallthru
      _
    // Predicated region
    $region10: #{tpu_custom_call.1} parent=1 // pred_check
      _
    $region11: #{tpu_custom_call.1} parent=1 // pred_check_branch
      %36 = sbr.rel (0) target = $region13
    $region12: #{tpu_custom_call.1} parent=1 // pred_region
      _
    $region13: #{tpu_custom_call.1} parent=1 // pred_fallthru
      _
    // Predicated region
    $region14: #{tpu_custom_call.1} parent=1 // pred_check
      _
    $region15: #{tpu_custom_call.1} parent=1 // pred_check_branch
      %38 = sbr.rel (0) target = $region17
    $region16: #{tpu_custom_call.1} parent=1 // pred_region
      %39 = dma.done [#allocation3], 256
    $region17: #{tpu_custom_call.1} parent=1 // pred_fallthru
      _
    // Predicated region
    $region18: #{tpu_custom_call.1} parent=1 // pred_check
      _
    $region19: #{tpu_custom_call.1} parent=1 // pred_check_branch
      %41 = sbr.rel (0) target = $region21
    $region20: #{tpu_custom_call.1} parent=1 // pred_region
      %42 = dma.done [#allocation6], 512
    $region21: #{tpu_custom_call.1} parent=1 // pred_fallthru
      _
    %v43 = vld [vmem:[#allocation2] sm:$0xff]
    %v44 = vld [vmem:[#allocation2 + $0x8] sm:$0xff]
    %v45 = vld [vmem:[#allocation5] sm:$0xff]
    %v46 = vld [vmem:[#allocation5 + $0x8] sm:$0xff]
    %v47 = vld [vmem:[#allocation5 + $0x10] sm:$0xff]
    %v48 = vld [vmem:[#allocation5 + $0x18] sm:$0xff]
    %v49 = vld [vmem:[%s2] sm:$0xff]
    %vm50 = vcmask 261120
    %v52 = vsel %vm50, %v43, 0
    %v55 = vsel %vm50, %v44, 0
    %57 = vmatprep.subr.mxu0 0.0
    %58 = vmatpush1.msra.mxu0 0.0
    %59 = vmatprep.subr.mxu0 0.0
    %60 = vmatpush1.msra.mxu0 0.0
    %61 = vmatprep.subr.mxu0 0.0
    %62 = vmatpush1.msra.mxu0 0.0
    %63 = vmatprep.subr.mxu0 0.0
    %64 = vmatpush1.msra.mxu0 0.0
    %65 = vmatprep.subr.mxu0 0.0
    %66 = vmatpush1.msra.mxu0 0.0
    %67 = vmatprep.subr.mxu0 0.0
    %68 = vmatpush1.msra.mxu0 0.0
    %69 = vmatprep.subr.mxu0 0.0
    %70 = vmatpush1.msra.mxu0 0.0
    %71 = vmatprep.subr.mxu0 0.0
    %72 = vmatpush1.msra.mxu0 0.0
    %73 = vmatprep.subr.mxu0 0.0
    %74 = vmatpush1.msra.mxu0 0.0
    %75 = vmatprep.subr.mxu0 0.0
    %76 = vmatpush1.msra.mxu0 0.0
    %77 = vmatprep.subr.mxu0 0.0
    %78 = vmatpush1.msra.mxu0 0.0
    %79 = vmatprep.subr.mxu0 0.0
    %80 = vmatpush1.msra.mxu0 0.0
    %81 = vmatprep.subr.mxu0 0.0
    %82 = vmatpush1.msra.mxu0 %v48
    %83 = vmatprep.subr.mxu0 0.0
    %84 = vmatpush1.msra.mxu0 %v47
    %85 = vmatprep.subr.mxu0 0.0
    %86 = vmatpush1.msra.mxu0 %v46
    %87 = vmatprep.subr.mxu0 0.0
    %88 = vmatpush1.msra.mxu0 %v45
    %89 = vmatprep.subr.mxu0 0.0
    %90 = vmatpush2.msra.mxu0 0.0
    %91 = vmatprep.subr.mxu0 0.0
    %92 = vmatpush2.msra.mxu0 0.0
    %93 = vmatprep.subr.mxu0 0.0
    %94 = vmatpush2.msra.mxu0 0.0
    %95 = vmatprep.subr.mxu0 0.0
    %96 = vmatpush2.msra.mxu0 0.0
    %97 = vmatprep.subr.mxu0 0.0
    %98 = vmatpush2.msra.mxu0 0.0
    %99 = vmatprep.subr.mxu0 0.0
    %100 = vmatpush2.msra.mxu0 0.0
    %101 = vmatprep.subr.mxu0 0.0
    %102 = vmatpush2.msra.mxu0 0.0
    %103 = vmatprep.subr.mxu0 0.0
    %104 = vmatpush2.msra.mxu0 0.0
    %105 = vmatprep.subr.mxu0 0.0
    %106 = vmatpush2.msra.mxu0 0.0
    %107 = vmatprep.subr.mxu0 0.0
    %108 = vmatpush2.msra.mxu0 0.0
    %109 = vmatprep.subr.mxu0 0.0
    %110 = vmatpush2.msra.mxu0 0.0
    %111 = vmatprep.subr.mxu0 0.0
    %112 = vmatpush2.msra.mxu0 0.0
    %113 = vmatprep.subr.mxu0 0.0
    %114 = vmatpush2.msra.mxu0 0.0
    %115 = vmatprep.subr.mxu0 0.0
    %116 = vmatpush2.msra.mxu0 0.0
    %117 = vmatprep.subr.mxu0 0.0
    %118 = vmatpush2.msra.mxu0 0.0
    %119 = vmatprep.subr.mxu0 0.0
    %120 = vmatpush2.msra.mxu0 0.0
    %121 = vmatprep.mubr.f32.mxu0 0.0
    %122 = vmatmul.mubr.f32.gmra.mxu0 %v52
    %v123 = vpop.f32.mrf.mxu0
    %v124 = vadd.f32 0.0, %v123
    %v125 = vpop.f32.mrf.mxu0
    %126 = vmatprep.mubr.f32.mxu0 0.0
    %127 = vmatmul.mubr.f32.gmra.mxu0 %v55
    %v128 = vpop.f32.mrf.mxu0
    %v129 = vadd.f32 0.0, %v128
    %v130 = vpop.f32.mrf.mxu0
    %131 = vdwg.mxu0
    %133 = vrot.lane.b32.xlu0 %v124, 112
    %v134 = vpop.permute.xlu0 %133
    %vm135 = vcmask 130048
    %v136 = vsel %vm135, %v124, 0
    %v138 = vsel %vm135, %v134, 0
    %140 = vmatprep.subr.mxu0 0.0
    %141 = vmatpush1.xpose.msra.mxu0 0.0
    %142 = vmatprep.subr.mxu0 0.0
    %143 = vmatpush1.xpose.msra.mxu0 0.0
    %144 = vmatprep.subr.mxu0 0.0
    %145 = vmatpush1.xpose.msra.mxu0 0.0
    %146 = vmatprep.subr.mxu0 0.0
    %147 = vmatpush1.xpose.msra.mxu0 0.0
    %148 = vmatprep.subr.mxu0 0.0
    %149 = vmatpush1.xpose.msra.mxu0 0.0
    %150 = vmatprep.subr.mxu0 0.0
    %151 = vmatpush1.xpose.msra.mxu0 0.0
    %152 = vmatprep.subr.mxu0 0.0
    %153 = vmatpush1.xpose.msra.mxu0 0.0
    %154 = vmatprep.subr.mxu0 0.0
    %155 = vmatpush1.xpose.msra.mxu0 0.0
    %156 = vmatprep.subr.mxu0 0.0
    %157 = vmatpush1.xpose.msra.mxu0 0.0
    %158 = vmatprep.subr.mxu0 0.0
    %159 = vmatpush1.xpose.msra.mxu0 0.0
    %160 = vmatprep.subr.mxu0 0.0
    %161 = vmatpush1.xpose.msra.mxu0 0.0
    %162 = vmatprep.subr.mxu0 0.0
    %163 = vmatpush1.xpose.msra.mxu0 0.0
    %164 = vmatprep.subr.mxu0 0.0
    %165 = vmatpush1.xpose.msra.mxu0 0.0
    %166 = vmatprep.subr.mxu0 0.0
    %167 = vmatpush1.xpose.msra.mxu0 0.0
    %168 = vmatprep.subr.mxu0 0.0
    %169 = vmatpush1.xpose.msra.mxu0 0.0
    %170 = vmatprep.subr.mxu0 0.0
    %171 = vmatpush1.xpose.msra.mxu0 %v138
    %172 = vmatprep.subr.mxu0 0.0
    %173 = vmatpush2.xpose.msra.mxu0 0.0
    %174 = vmatprep.subr.mxu0 0.0
    %175 = vmatpush2.xpose.msra.mxu0 0.0
    %176 = vmatprep.subr.mxu0 0.0
    %177 = vmatpush2.xpose.msra.mxu0 0.0
    %178 = vmatprep.subr.mxu0 0.0
    %179 = vmatpush2.xpose.msra.mxu0 0.0
    %180 = vmatprep.subr.mxu0 0.0
    %181 = vmatpush2.xpose.msra.mxu0 0.0
    %182 = vmatprep.subr.mxu0 0.0
    %183 = vmatpush2.xpose.msra.mxu0 0.0
    %184 = vmatprep.subr.mxu0 0.0
    %185 = vmatpush2.xpose.msra.mxu0 0.0
    %186 = vmatprep.subr.mxu0 0.0
    %187 = vmatpush2.xpose.msra.mxu0 0.0
    %188 = vmatprep.subr.mxu0 0.0
    %189 = vmatpush2.xpose.msra.mxu0 0.0
    %190 = vmatprep.subr.mxu0 0.0
    %191 = vmatpush2.xpose.msra.mxu0 0.0
    %192 = vmatprep.subr.mxu0 0.0
    %193 = vmatpush2.xpose.msra.mxu0 0.0
    %194 = vmatprep.subr.mxu0 0.0
    %195 = vmatpush2.xpose.msra.mxu0 0.0
    %196 = vmatprep.subr.mxu0 0.0
    %197 = vmatpush2.xpose.msra.mxu0 0.0
    %198 = vmatprep.subr.mxu0 0.0
    %199 = vmatpush2.xpose.msra.mxu0 0.0
    %200 = vmatprep.subr.mxu0 0.0
    %201 = vmatpush2.xpose.msra.mxu0 0.0
    %202 = vmatprep.subr.mxu0 0.0
    %203 = vmatpush2.xpose.msra.mxu0 0.0
    %204 = vmatprep.mubr.f32.mxu0 0.0
    %205 = vmatmul.mubr.f32.gmra.mxu0 %v136
    %v206 = vpop.f32.mrf.mxu0
    %v207 = vadd.f32 0.0, %v206
    %v208 = vpop.f32.mrf.mxu0
    %209 = vdwg.mxu0
    %211 = vrot.lane.b32.xlu0 %v129, 112
    %v212 = vpop.permute.xlu0 %211
    %v213 = vsel %vm135, %v129, 0
    %v215 = vsel %vm135, %v212, 0
    %217 = vmatprep.subr.mxu0 0.0
    %218 = vmatpush1.xpose.msra.mxu0 0.0
    %219 = vmatprep.subr.mxu0 0.0
    %220 = vmatpush1.xpose.msra.mxu0 0.0
    %221 = vmatprep.subr.mxu0 0.0
    %222 = vmatpush1.xpose.msra.mxu0 0.0
    %223 = vmatprep.subr.mxu0 0.0
    %224 = vmatpush1.xpose.msra.mxu0 0.0
    %225 = vmatprep.subr.mxu0 0.0
    %226 = vmatpush1.xpose.msra.mxu0 0.0
    %227 = vmatprep.subr.mxu0 0.0
    %228 = vmatpush1.xpose.msra.mxu0 0.0
    %229 = vmatprep.subr.mxu0 0.0
    %230 = vmatpush1.xpose.msra.mxu0 0.0
    %231 = vmatprep.subr.mxu0 0.0
    %232 = vmatpush1.xpose.msra.mxu0 0.0
    %233 = vmatprep.subr.mxu0 0.0
    %234 = vmatpush1.xpose.msra.mxu0 0.0
    %235 = vmatprep.subr.mxu0 0.0
    %236 = vmatpush1.xpose.msra.mxu0 0.0
    %237 = vmatprep.subr.mxu0 0.0
    %238 = vmatpush1.xpose.msra.mxu0 0.0
    %239 = vmatprep.subr.mxu0 0.0
    %240 = vmatpush1.xpose.msra.mxu0 0.0
    %241 = vmatprep.subr.mxu0 0.0
    %242 = vmatpush1.xpose.msra.mxu0 0.0
    %243 = vmatprep.subr.mxu0 0.0
    %244 = vmatpush1.xpose.msra.mxu0 0.0
    %245 = vmatprep.subr.mxu0 0.0
    %246 = vmatpush1.xpose.msra.mxu0 0.0
    %247 = vmatprep.subr.mxu0 0.0
    %248 = vmatpush1.xpose.msra.mxu0 %v215
    %249 = vmatprep.subr.mxu0 0.0
    %250 = vmatpush2.xpose.msra.mxu0 0.0
    %251 = vmatprep.subr.mxu0 0.0
    %252 = vmatpush2.xpose.msra.mxu0 0.0
    %253 = vmatprep.subr.mxu0 0.0
    %254 = vmatpush2.xpose.msra.mxu0 0.0
    %255 = vmatprep.subr.mxu0 0.0
    %256 = vmatpush2.xpose.msra.mxu0 0.0
    %257 = vmatprep.subr.mxu0 0.0
    %258 = vmatpush2.xpose.msra.mxu0 0.0
    %259 = vmatprep.subr.mxu0 0.0
    %260 = vmatpush2.xpose.msra.mxu0 0.0
    %261 = vmatprep.subr.mxu0 0.0
    %262 = vmatpush2.xpose.msra.mxu0 0.0
    %263 = vmatprep.subr.mxu0 0.0
    %264 = vmatpush2.xpose.msra.mxu0 0.0
    %265 = vmatprep.subr.mxu0 0.0
    %266 = vmatpush2.xpose.msra.mxu0 0.0
    %267 = vmatprep.subr.mxu0 0.0
    %268 = vmatpush2.xpose.msra.mxu0 0.0
    %269 = vmatprep.subr.mxu0 0.0
    %270 = vmatpush2.xpose.msra.mxu0 0.0
    %271 = vmatprep.subr.mxu0 0.0
    %272 = vmatpush2.xpose.msra.mxu0 0.0
    %273 = vmatprep.subr.mxu0 0.0
    %274 = vmatpush2.xpose.msra.mxu0 0.0
    %275 = vmatprep.subr.mxu0 0.0
    %276 = vmatpush2.xpose.msra.mxu0 0.0
    %277 = vmatprep.subr.mxu0 0.0
    %278 = vmatpush2.xpose.msra.mxu0 0.0
    %279 = vmatprep.subr.mxu0 0.0
    %280 = vmatpush2.xpose.msra.mxu0 0.0
    %281 = vmatprep.mubr.f32.mxu0 0.0
    %282 = vmatmul.mubr.f32.gmra.mxu0 %v213
    %v283 = vpop.f32.mrf.mxu0
    %v284 = vadd.f32 0.0, %v283
    %v285 = vpop.f32.mrf.mxu0
    %286 = vdwg.mxu0
    %v287 = vlaneseq
    %v288 = vshrl.u32 %v287, 7
    %v289 = vlaneseq
    %v290 = vand.u32 %v289, 127
    %vm291 = vcmp.eq.s32.totalorder %v288, %v290
    %v292 = vsel %vm291, 1, 0
    %vm293 = vcmp.eq.s32.totalorder %v292, 1
    %v294 = vsel %vm293, 0.0, %v207
    %v295 = vsel %vm293, 0.0, %v284
    %vm296 = vcmask 64512
    %v297 = vsel %vm296, %v294, -inf
    %298 = vmax.xlane.f32.xlu0 %v297
    %v299 = vpop.xlane.xlu0 %298
    %v300 = vsel %vm296, %v295, -inf
    %301 = vmax.xlane.f32.xlu0 %v300
    %v302 = vpop.xlane.xlu0 %301
    %v303 = vsub.f32 %v294, %v299
    %v304 = vsub.f32 %v295, %v302
    %v305 = vmul.f32 %v303, 1.442695
    %v306 = vpow.pop %v305
    %v307 = vmul.f32 %v304, 1.442695
    %v308 = vpow.pop %v307
    %v309 = vsel %vm296, %v306, 0.0
    %310 = vadd.xlane.f32.xlu0 %v309
    %v311 = vpop.xlane.xlu0 %310
    %v312 = vsel %vm296, %v308, 0.0
    %313 = vadd.xlane.f32.xlu0 %v312
    %v314 = vpop.xlane.xlu0 %313
    %v315 = vsub.f32 0.0, %v299
    %v316 = vsub.f32 0.0, %v302
    %v317 = vmul.f32 %v315, 1.442695
    %v318 = vpow.pop %v317
    %v319 = vmul.f32 %v316, 1.442695
    %v320 = vpow.pop %v319
    %v321 = vrcp.pop %v311
    %v322 = vmul.f32 %v318, %v321
    %v323 = vrcp.pop %v314
    %v324 = vmul.f32 %v320, %v323
    %v325 = vsub.f32 1.0, %v322
    %v326 = vsub.f32 1.0, %v324
    %v327 = vadd.f32 %v325, %v49
    %v328 = vadd.f32 %v326, %v49
    %330 = vset.pattern.permute.xlu0 0
    %331 = vperm.xlu0 %330, %v327
    %v332 = vpop.permute.xlu0 %331
    %335 = vset.pattern.permute.xlu0 0
    %336 = vperm.xlu0 %335, %v328
    %v337 = vpop.permute.xlu0 %336
    %v339 = vmul.f32 %v124, %v332
    %v340 = vmul.f32 %v129, %v337
    %343 = vrot.lane.b32.xlu0 %v339, 96
    %v344 = vpop.permute.xlu0 %343
    %345 = vrot.lane.b32.xlu0 %v340, 96
    %v346 = vpop.permute.xlu0 %345
    %349 = vst.msk [vmem:[#allocation7] sm:$0xff] %vm50, %v344
    %350 = vst.msk [vmem:[#allocation7 + $0x8] sm:$0xff] %vm50, %v346
    // Predicated region
    $region22: #{tpu_custom_call.1} parent=1 // pred_check
      _
    $region23: #{tpu_custom_call.1} parent=1 // pred_check_branch
      %352 = sbr.rel (0) target = $region25
    $region24: #{tpu_custom_call.1} parent=1 // pred_region
      %s354 = ssub.s32 256, 256
      %355 = vsyncadd [#allocation4], %s354
      %s356 = sshll.u32 [#allocation7], 4
      %s357 = int_to_ptr.vmem [resolvable:$true] %s356
      %362 = dma.vmem_to_hbm [thread:$0]  %s357, 256, %s3, [#allocation4], 128, 128, 8
    $region25: #{tpu_custom_call.1} parent=1 // pred_fallthru
      _
    // Predicated region
    $region26: #{tpu_custom_call.1} parent=1 // pred_check
      _
    $region27: #{tpu_custom_call.1} parent=1 // pred_check_branch
      %364 = sbr.rel (0) target = $region29
    $region28: #{tpu_custom_call.1} parent=1 // pred_region
      %365 = dma.done [#allocation4], 256
    $region29: #{tpu_custom_call.1} parent=1 // pred_fallthru
      _
    %366 = vsyncpa [#allocation3], 1
    %367 = vsyncpa [#allocation6], 1
    %368 = vsyncpa [#allocation4], 1

</llo_original>
